<compile_context>
chip_gen: v7x
topology: tpu7x:2x2x1
jax: 0.10.0
libtpu: 0.0.40
codegen_flags: <defaults>
</compile_context>

<pallas_src>
import jax
import jax.numpy as jnp
from jax.experimental import pallas as pl
from jax.experimental.pallas import tpu as pltpu


# ---------------------------------------------------------------------------
# Kernels
# ---------------------------------------------------------------------------

def _resident_kernel(emb_ref, w1_ref, b1_ref, w2_ref, b2_ref, recon_ref):
    """Single-step decoder: emb, all weights and the output are resident in VMEM."""
    h = jnp.dot(emb_ref[...], w1_ref[...],
                preferred_element_type=jnp.float32) + b1_ref[...]
    h = jnp.maximum(h, 0.01 * h)                                   # LeakyReLU(0.01)
    out = jnp.dot(h.astype(jnp.bfloat16), w2_ref[...],
                  preferred_element_type=jnp.float32) + b2_ref[...]
    recon_ref[...] = out.astype(recon_ref.dtype)


def _tiled_kernel(emb_ref, w1_ref, b1_ref, w2_ref, b2_ref, recon_ref, h_ref):
    """2-D grid (batch tile b, output-column tile j).

    Layer 1 is computed once per batch tile (at j == 0) into a bf16 VMEM scratch
    that is reused by every streamed w2 column tile of that batch tile.
    """
    @pl.when(pl.program_id(1) == 0)
    def _():
        h = jnp.dot(emb_ref[...], w1_ref[...],
                    preferred_element_type=jnp.float32) + b1_ref[...]
        h = jnp.maximum(h, 0.01 * h)                               # LeakyReLU(0.01)
        h_ref[...] = h.astype(jnp.bfloat16)

    out = jnp.dot(h_ref[...], w2_ref[...],
                  preferred_element_type=jnp.float32) + b2_ref[...]
    recon_ref[...] = out.astype(recon_ref.dtype)


# ---------------------------------------------------------------------------
# Tiling helpers
# ---------------------------------------------------------------------------

def _round_up(x, m):
    return ((x + m - 1) // m) * m


def _tpu_generation():
    try:
        kind = jax.devices()[0].device_kind.lower()
    except Exception:  # pragma: no cover - defensive (e.g. interpret mode)
        return "unknown"
    if "v7" in kind:
        return "v7x"
    if "v6" in kind:
        return "v6e"
    if "v5" in kind:
        return "v5e"
    return "unknown"


def _pick_tile_n(n, h_dim, generation):
    """Lane-dense w2 column tile that divides n."""
    if n % 128 != 0:
        # Fallback: single full tile (masked partial stores).  Correct but slow —
        # prefer numBits that keeps 4*numBits a multiple of 128.
        return n
    if generation == "v7x":
        # Exactly 2 column steps so each TensorCore streams one contiguous slab.
        target = max(n // 2, 128)
    else:
        # Per-step fixed cost ~0.35 us; 1024-wide tiles keep DMA >> step overhead
        # on v5e/v6e while staying far below the scoped-VMEM limit.
        target = 1024
    # Cap the streamed (double-buffered) w2 tile around 4 MiB for large numBits.
    cap_cols = ((4 * 1024 * 1024) // (h_dim * 2)) // 128 * 128
    target = min(target, max(cap_cols, 128), n)
    tn = max((target // 128) * 128, 128)
    while n % tn != 0:
        tn -= 128
    return tn


def _batch_tiling(batch, generation, tb=None):
    """Pick a batch tile that is a multiple of 16 (full bf16 sublane packing)."""
    b16 = max(_round_up(batch, 16), 16)
    if tb is None:
        target = 128 if generation == "v5e" else 256   # MXU rows: 128 (v5e) / 256
        tb = min(target, b16)
    else:
        tb = min(max(_round_up(tb, 16), 16), b16)
    bp = _round_up(batch, tb)
    return bp, tb


# ---------------------------------------------------------------------------
# Decoder launches
# ---------------------------------------------------------------------------

_RESIDENT_WEIGHT_BUDGET = 12 * 1024 * 1024   # double-buffered weights must fit easily


def _decode_resident(emb_bf16, params, out_dtype):
    """Single grid step, everything resident.  For the launch-bound B==1 path."""
    w1, b1, w2, b2 = params
    batch, k = emb_bf16.shape
    h_dim = w1.shape[1]
    n = w2.shape[1]

    bp = max(_round_up(batch, 16), 16)
    emb_p = emb_bf16 if bp == batch else jnp.pad(emb_bf16, ((0, bp - batch), (0, 0)))

    flops = 2 * bp * (k * h_dim + h_dim * n)
    bytes_accessed = (emb_p.size * emb_p.dtype.itemsize
                      + sum(a.size * a.dtype.itemsize for a in (w1, b1, w2, b2))
                      + bp * n * jnp.dtype(out_dtype).itemsize)

    recon_p = pl.pallas_call(
        _resident_kernel,
        out_shape=jax.ShapeDtypeStruct((bp, n), out_dtype),
        grid=(1,),
        in_specs=[
            pl.BlockSpec((bp, k), lambda i: (0, 0)),      # emb (bf16)
            pl.BlockSpec((k, h_dim), lambda i: (0, 0)),   # w1 (bf16)
            pl.BlockSpec((1, h_dim), lambda i: (0, 0)),   # b1 (f32)
            pl.BlockSpec((h_dim, n), lambda i: (0, 0)),   # w2 (bf16)
            pl.BlockSpec((1, n), lambda i: (0, 0)),       # b2 (f32)
        ],
        out_specs=pl.BlockSpec((bp, n), lambda i: (0, 0)),
        compiler_params=pltpu.CompilerParams(dimension_semantics=("arbitrary",)),
        cost_estimate=pl.CostEstimate(flops=int(flops), transcendentals=0,
                                      bytes_accessed=int(bytes_accessed)),
    )(emb_p, w1, b1, w2, b2)
    return recon_p[:batch]


def _decode_tiled(emb_bf16, params, *, tn, tb, out_dtype, generation):
    """Batched throughput path: 2-D grid over (batch tiles, w2 column tiles)."""
    w1, b1, w2, b2 = params
    batch, k = emb_bf16.shape
    h_dim = w1.shape[1]
    n = w2.shape[1]

    bp, tb = _batch_tiling(batch, generation, tb)
    if tn is None or n % tn != 0 or (tn % 128 != 0 and tn != n):
        tn = _pick_tile_n(n, h_dim, generation)

    emb_p = emb_bf16 if bp == batch else jnp.pad(emb_bf16, ((0, bp - batch), (0, 0)))
    nb = bp // tb
    nj = n // tn

    # Resident layer-1 weights: single-buffer them once they are large enough that
    # default double-buffering would threaten the scoped-VMEM limit (numBits >~ 2048).
    w1_bytes = w1.size * w1.dtype.itemsize
    if w1_bytes >= 8 * 1024 * 1024:
        w1_spec = pl.BlockSpec((k, h_dim), lambda b, j: (0, 0),
                               pipeline_mode=pl.Buffered(1))
        b1_spec = pl.BlockSpec((1, h_dim), lambda b, j: (0, 0),
                               pipeline_mode=pl.Buffered(1))
    else:
        w1_spec = pl.BlockSpec((k, h_dim), lambda b, j: (0, 0))
        b1_spec = pl.BlockSpec((1, h_dim), lambda b, j: (0, 0))

    # v7x has 2 TensorCores per chip: shard the batch axis across them when it has
    # >= 2 tiles so both cores issue w2 DMAs.  The column axis must stay "arbitrary"
    # because the layer-1 scratch is carried across it.
    if generation == "v7x" and nb >= 2:
        dim_sems = (pltpu.CORE_PARALLEL, pltpu.ARBITRARY)
    else:
        dim_sems = ("parallel", "arbitrary")

    out_itemsize = jnp.dtype(out_dtype).itemsize
    flops = 2 * bp * (k * h_dim + h_dim * n)          # layer 1 computed once per sample
    bytes_accessed = (emb_p.size * emb_p.dtype.itemsize
                      + w1.size * w1.dtype.itemsize + b1.size * b1.dtype.itemsize
                      + nb * (w2.size * w2.dtype.itemsize + b2.size * b2.dtype.itemsize)
                      + bp * n * out_itemsize)

    recon_p = pl.pallas_call(
        _tiled_kernel,
        out_shape=jax.ShapeDtypeStruct((bp, n), out_dtype),
        grid=(nb, nj),
        in_specs=[
            pl.BlockSpec((tb, k), lambda b, j: (b, 0)),      # emb: per batch tile (bf16)
            w1_spec,                                          # w1: resident (bf16)
            b1_spec,                                          # b1: resident (f32)
            pl.BlockSpec((h_dim, tn), lambda b, j: (0, j)),   # w2: streamed per col tile
            pl.BlockSpec((1, tn), lambda b, j: (0, j)),       # b2: streamed per col tile
        ],
        out_specs=pl.BlockSpec((tb, tn), lambda b, j: (b, j)),
        scratch_shapes=[pltpu.VMEM((tb, h_dim), jnp.bfloat16)],  # layer-1 activations
        compiler_params=pltpu.CompilerParams(dimension_semantics=dim_sems),
        cost_estimate=pl.CostEstimate(flops=int(flops), transcendentals=0,
                                      bytes_accessed=int(bytes_accessed)),
    )(emb_p, w1, b1, w2, b2)
    return recon_p[:batch]


def _decode(emb, params, *, tn=None, tb=None, out_dtype=jnp.float32,
            prefer_resident=False):
    """recon = Linear -> LeakyReLU -> Linear for emb of shape (B, numBits)."""
    generation = _tpu_generation()
    # The kernel computes on bf16 emb anyway — cast in the wrapper so HBM traffic
    # for emb is halved; the f32 emb returned by forward() is untouched.
    emb_bf16 = emb.astype(jnp.bfloat16)
    weight_bytes = sum(a.size * a.dtype.itemsize for a in params)
    if prefer_resident and 2 * weight_bytes <= _RESIDENT_WEIGHT_BUDGET:
        # Launch/step-overhead-bound regime (module-faithful batch = 1): one grid
        # step, everything resident.
        # TODO(synk): if called repeatedly back-to-back, hide the weight DMA behind
        # preceding XLA ops via a cross-pallas_call prefetch (semaphore future, P10).
        return _decode_resident(emb_bf16, params, out_dtype)
    return _decode_tiled(emb_bf16, params, tn=tn, tb=tb,
                         out_dtype=out_dtype, generation=generation)


# ---------------------------------------------------------------------------
# Module-level forward wrappers
# ---------------------------------------------------------------------------

def memo_ae_forward(x, params, *, out_dtype=jnp.float32):
    """Module-faithful forward: returns (recon, emb) with batch = 1."""
    w1 = params[0]
    num_bits = w1.shape[0]
    # Layout glue (returned value anyway): reshape(-1, 4) -> column 0 -> (1, numBits).
    emb = jnp.reshape(jnp.reshape(x, (-1, 4))[:, 0], (1, num_bits)).astype(jnp.float32)
    recon = _decode(emb, params, out_dtype=out_dtype, prefer_resident=True)
    return recon, emb


def memo_ae_forward_batched(x_batch, params, *, tn=None, tb=None,
                            out_dtype=jnp.float32):
    """Equivalent to running memo_ae_forward independently on each x_batch[i]
    (each sample must contain numBits*4 elements); one kernel launch amortizes the
    bf16 weight stream over the whole batch."""
    w1 = params[0]
    num_bits = w1.shape[0]
    batch = x_batch.shape[0]
    emb = jnp.reshape(x_batch, (batch, num_bits, 4))[:, :, 0].astype(jnp.float32)
    recon = _decode(emb, params, tn=tn, tb=tb, out_dtype=out_dtype,
                    prefer_resident=False)
    return recon, emb


def init_params(num_bits, key):
    """nn.Linear-style init; weights stored (in, out) and cast to bfloat16."""
    k1, k2, k3, k4 = jax.random.split(key, 4)
    hid = 2 * num_bits
    out_dim = 4 * num_bits
    bound1 = num_bits ** -0.5
    bound2 = hid ** -0.5
    w1 = jax.random.uniform(k1, (num_bits, hid), jnp.float32, -bound1, bound1)
    b1 = jax.random.uniform(k2, (1, hid), jnp.float32, -bound1, bound1)
    w2 = jax.random.uniform(k3, (hid, out_dim), jnp.float32, -bound2, bound2)
    b2 = jax.random.uniform(k4, (1, out_dim), jnp.float32, -bound2, bound2)
    return (w1.astype(jnp.bfloat16), b1, w2.astype(jnp.bfloat16), b2)


if __name__ == "__main__":
    NUM_BITS = 128          # module default is 512; small shape for the demo
    key = jax.random.PRNGKey(0)
    k_x, k_p, k_xb = jax.random.split(key, 3)

    params = init_params(NUM_BITS, k_p)
    w1, b1, w2, b2 = params

    # Reference MLP with the same bf16 weight quantization and f32 accumulation.
    def _ref(e):
        hh = jnp.dot(e.astype(jnp.bfloat16), w1,
                     preferred_element_type=jnp.float32) + b1
        hh = jnp.maximum(hh, 0.01 * hh)
        return jnp.dot(hh.astype(jnp.bfloat16), w2,
                       preferred_element_type=jnp.float32) + b2

    # ---- batch-1, module-faithful path (single-step fully-resident kernel) ----
    x = (jax.random.uniform(k_x, (NUM_BITS, 4)) < 0.1).astype(jnp.float32)
    recon, emb = memo_ae_forward(x, params)
    recon = jax.block_until_ready(recon)
    emb = jax.block_until_ready(emb)

    emb_ref = jnp.reshape(jnp.reshape(x, (-1, 4))[:, 0], (1, NUM_BITS))
    recon_ref = _ref(emb_ref)
    assert recon.shape == (1, 4 * NUM_BITS) and recon.dtype == jnp.float32
    assert emb.shape == (1, NUM_BITS)
    assert jnp.array_equal(emb, emb_ref)
    assert jnp.allclose(recon, recon_ref, atol=1e-3, rtol=1e-3)

    # ---- batched throughput path (tiled kernel: 3 batch tiles x 2 column tiles) ----
    B = 40                  # pads to 48 rows -> 3 batch tiles of 16 with tb=16
    xb = (jax.random.uniform(k_xb, (B, NUM_BITS, 4)) < 0.1).astype(jnp.float32)
    recon_b, emb_b = memo_ae_forward_batched(xb, params, tn=256, tb=16)
    recon_b = jax.block_until_ready(recon_b)
    emb_b = jax.block_until_ready(emb_b)

    emb_b_ref = xb[:, :, 0]
    recon_b_ref = _ref(emb_b_ref)
    assert recon_b.shape == (B, 4 * NUM_BITS)
    assert emb_b.shape == (B, NUM_BITS)
    assert jnp.array_equal(emb_b, emb_b_ref)
    assert jnp.allclose(recon_b, recon_b_ref, atol=1e-3, rtol=1e-3)

    # ---- bf16-output knob (halves recon writeback bytes in the batched regime) ----
    recon_h, _ = memo_ae_forward_batched(xb, params, out_dtype=jnp.bfloat16)
    recon_h = jax.block_until_ready(recon_h)
    assert recon_h.dtype == jnp.bfloat16
    assert jnp.allclose(recon_h.astype(jnp.float32), recon_b_ref,
                        atol=5e-2, rtol=5e-2)

    print("KERNEL_OK")
</pallas_src>

<mosaic_0001>
module attributes {stable_mosaic.version = 11 : i64} {
  func.func @_resident_kernel(%arg0: i32, %arg1: memref<16x128xbf16, #tpu.memory_space<vmem>>, %arg2: memref<128x256xbf16, #tpu.memory_space<vmem>>, %arg3: memref<1x256xf32, #tpu.memory_space<vmem>>, %arg4: memref<256x512xbf16, #tpu.memory_space<vmem>>, %arg5: memref<1x512xf32, #tpu.memory_space<vmem>>, %arg6: memref<16x512xf32, #tpu.memory_space<vmem>>) attributes {dimension_semantics = [#tpu.dimension_semantics<arbitrary>], iteration_bounds = array<i64: 1>, scalar_prefetch = 0 : i64, scratch_operands = 0 : i64, tpu.core_type = #tpu.core_type<tc>, window_params = [{pipeline_mode = #tpu.pipeline_mode<synchronous>, transform_indices = @transform_0, window_bounds = array<i64: 16, 128>}, {pipeline_mode = #tpu.pipeline_mode<synchronous>, transform_indices = @transform_1, window_bounds = array<i64: 128, 256>}, {pipeline_mode = #tpu.pipeline_mode<synchronous>, transform_indices = @transform_2, window_bounds = array<i64: 1, 256>}, {pipeline_mode = #tpu.pipeline_mode<synchronous>, transform_indices = @transform_3, window_bounds = array<i64: 256, 512>}, {pipeline_mode = #tpu.pipeline_mode<synchronous>, transform_indices = @transform_4, window_bounds = array<i64: 1, 512>}, {pipeline_mode = #tpu.pipeline_mode<synchronous>, transform_indices = @transform_5, window_bounds = array<i64: 16, 512>}]} {
    %c0 = arith.constant 0 : index
    %c0_0 = arith.constant 0 : index
    %0 = vector.load %arg1[%c0, %c0_0] : memref<16x128xbf16, #tpu.memory_space<vmem>>, vector<16x128xbf16>
    %c0_1 = arith.constant 0 : index
    %c0_2 = arith.constant 0 : index
    %1 = vector.load %arg2[%c0_1, %c0_2] : memref<128x256xbf16, #tpu.memory_space<vmem>>, vector<128x256xbf16>
    %cst = arith.constant dense<0.000000e+00> : vector<16x256xf32>
    %2 = tpu.matmul %0, %1, %cst {dimension_numbers = #tpu.dot_dimension_numbers<[1], [0], [0], [1], [0, 0, 1, 1], [], []>} : vector<16x128xbf16>, vector<128x256xbf16>, vector<16x256xf32> -> vector<16x256xf32>
    %c0_3 = arith.constant 0 : index
    %c0_4 = arith.constant 0 : index
    %3 = vector.load %arg3[%c0_3, %c0_4] : memref<1x256xf32, #tpu.memory_space<vmem>>, vector<1x256xf32>
    %4 = vector.broadcast %3 : vector<1x256xf32> to vector<16x256xf32>
    %5 = arith.addf %2, %4 : vector<16x256xf32>
    %cst_5 = arith.constant 0.00999999977 : f32
    %6 = vector.broadcast %cst_5 : f32 to vector<16x256xf32>
    %7 = arith.mulf %6, %5 : vector<16x256xf32>
    %8 = arith.maximumf %5, %7 : vector<16x256xf32>
    %9 = arith.truncf %8 : vector<16x256xf32> to vector<16x256xbf16>
    %c0_6 = arith.constant 0 : index
    %c0_7 = arith.constant 0 : index
    %10 = vector.load %arg4[%c0_6, %c0_7] : memref<256x512xbf16, #tpu.memory_space<vmem>>, vector<256x512xbf16>
    %cst_8 = arith.constant dense<0.000000e+00> : vector<16x512xf32>
    %11 = tpu.matmul %9, %10, %cst_8 {dimension_numbers = #tpu.dot_dimension_numbers<[1], [0], [0], [1], [0, 0, 1, 1], [], []>} : vector<16x256xbf16>, vector<256x512xbf16>, vector<16x512xf32> -> vector<16x512xf32>
    %c0_9 = arith.constant 0 : index
    %c0_10 = arith.constant 0 : index
    %12 = vector.load %arg5[%c0_9, %c0_10] : memref<1x512xf32, #tpu.memory_space<vmem>>, vector<1x512xf32>
    %13 = vector.broadcast %12 : vector<1x512xf32> to vector<16x512xf32>
    %14 = arith.addf %11, %13 : vector<16x512xf32>
    %c0_11 = arith.constant 0 : index
    %c0_12 = arith.constant 0 : index
    %15 = vector.load %arg6[%c0_11, %c0_12] : memref<16x512xf32, #tpu.memory_space<vmem>>, vector<16x512xf32>
    tpu.vector_store %arg6[%c0_11, %c0_12], %14 {strides = array<i32>} : memref<16x512xf32, #tpu.memory_space<vmem>>, vector<16x512xf32>,
    return
  }
  func.func @transform_0(%arg0: i32) -> (i32, i32) {
    %c0_i32 = arith.constant 0 : i32
    %c0_i32_0 = arith.constant 0 : i32
    %c0_i32_1 = arith.constant 0 : i32
    return %c0_i32, %c0_i32_0 : i32, i32
  }
  func.func @transform_1(%arg0: i32) -> (i32, i32) {
    %c0_i32 = arith.constant 0 : i32
    %c0_i32_0 = arith.constant 0 : i32
    %c0_i32_1 = arith.constant 0 : i32
    return %c0_i32, %c0_i32_0 : i32, i32
  }
  func.func @transform_2(%arg0: i32) -> (i32, i32) {
    %c0_i32 = arith.constant 0 : i32
    %c0_i32_0 = arith.constant 0 : i32
    %c0_i32_1 = arith.constant 0 : i32
    return %c0_i32, %c0_i32_0 : i32, i32
  }
  func.func @transform_3(%arg0: i32) -> (i32, i32) {
    %c0_i32 = arith.constant 0 : i32
    %c0_i32_0 = arith.constant 0 : i32
    %c0_i32_1 = arith.constant 0 : i32
    return %c0_i32, %c0_i32_0 : i32, i32
  }
  func.func @transform_4(%arg0: i32) -> (i32, i32) {
    %c0_i32 = arith.constant 0 : i32
    %c0_i32_0 = arith.constant 0 : i32
    %c0_i32_1 = arith.constant 0 : i32
    return %c0_i32, %c0_i32_0 : i32, i32
  }
  func.func @transform_5(%arg0: i32) -> (i32, i32) {
    %c0_i32 = arith.constant 0 : i32
    %c0_i32_0 = arith.constant 0 : i32
    %c0_i32_1 = arith.constant 0 : i32
    return %c0_i32, %c0_i32_0 : i32, i32
  }
}

</mosaic_0001>

<llo_original>
// kernel: tpu_custom_call.1
$region0: #{tpu_custom_call.1}
  #allocation0 [shape = 'u32[]', space=smem, size = 0x4, offset = 0x4, fixed_abs, tag = 'smem constant byte address 0x4 - core index']
  #allocation1 [shape = 'u32[144,128]{1,0:T(1,128)}', space=vmem, size = 0x12000, scoped, tag = 'internal scratch']
  %s0 = inlined_call_operand.hbm [shape: bf16[16,128], index: 0, kind: input, shape index: {}]
  %s1 = inlined_call_operand.hbm [shape: bf16[128,256], index: 1, kind: input, shape index: {}]
  %s2 = inlined_call_operand.vmem [shape: f32[1,256], index: 2, kind: input, shape index: {}]
  %s3 = inlined_call_operand.hbm [shape: bf16[256,512], index: 3, kind: input, shape index: {}]
  %s4 = inlined_call_operand.vmem [shape: f32[1,512], index: 4, kind: input, shape index: {}]
  %s5 = inlined_call_operand.hbm [shape: f32[16,512], index: 5, kind: output, shape index: {}]
  %s6 = sld [smem:[#allocation0]]
  $region42: #{tpu_custom_call.1} parent=0
    _
  %s8 = ssub.s32 1, %s6
  %s9 = scalar_select 0, %s8, %s6
  $region1: #{tpu_custom_call.1} parent=0
    #allocation2 [shape = 'u8[4096]{0}', space=vmem, size = 0x1000, scoped, tag = 'input window, operand 0, single buffered']
    #allocation3 [shape = 's32[1]{0}', space=sflag, size = 0x4, scoped, tag = 'scoped memory for tpu_custom_call.1']
    #allocation4 [shape = 's32[1]{0}', space=sflag, size = 0x4, scoped, tag = 'scoped memory for tpu_custom_call.1']
    #allocation5 [shape = 'u8[65536]{0}', space=vmem, size = 0x10000, scoped, tag = 'input window, operand 1, single buffered']
    #allocation6 [shape = 's32[1]{0}', space=sflag, size = 0x4, scoped, tag = 'scoped memory for tpu_custom_call.1']
    #allocation7 [shape = 'u8[262144]{0}', space=vmem, size = 0x40000, scoped, tag = 'input window, operand 3, single buffered']
    #allocation8 [shape = 'u8[32768]{0}', space=vmem, size = 0x8000, scoped, tag = 'output window, operand 0, single buffered']
    %10 = vsyncpa [#allocation3], 0
    %11 = vsyncpa [#allocation6], 0
    %12 = vsyncpa [#allocation4], 0
    // Predicated region
    $region2: #{tpu_custom_call.1} parent=1 // pred_check
      _
    $region3: #{tpu_custom_call.1} parent=1 // pred_check_branch
      %14 = sbr.rel (0) target = $region5
    $region4: #{tpu_custom_call.1} parent=1 // pred_region
      %s16 = ssub.s32 128, 128
      %17 = vsyncadd [#allocation3], %s16
      %s18 = sshll.u32 [#allocation2], 4
      %s19 = int_to_ptr.vmem [resolvable:$true] %s18
      %24 = dma.hbm_to_vmem [thread:$0]  %s0, 128, %s19, [#allocation3], 64, 64, 4
    $region5: #{tpu_custom_call.1} parent=1 // pred_fallthru
      _
    // Predicated region
    $region6: #{tpu_custom_call.1} parent=1 // pred_check
      _
    $region7: #{tpu_custom_call.1} parent=1 // pred_check_branch
      %26 = sbr.rel (0) target = $region9
    $region8: #{tpu_custom_call.1} parent=1 // pred_region
      %s28 = ssub.s32 2048, 2048
      %29 = vsyncadd [#allocation6], %s28
      %s30 = sshll.u32 [#allocation5], 4
      %s31 = int_to_ptr.vmem [resolvable:$true] %s30
      %36 = dma.hbm_to_vmem [thread:$0]  %s1, 2048, %s31, [#allocation6], 128, 128, 8
    $region9: #{tpu_custom_call.1} parent=1 // pred_fallthru
      _
    // Predicated region
    $region10: #{tpu_custom_call.1} parent=1 // pred_check
      _
    $region11: #{tpu_custom_call.1} parent=1 // pred_check_branch
      %38 = sbr.rel (0) target = $region13
    $region12: #{tpu_custom_call.1} parent=1 // pred_region
      _
    $region13: #{tpu_custom_call.1} parent=1 // pred_fallthru
      _
    // Predicated region
    $region14: #{tpu_custom_call.1} parent=1 // pred_check
      _
    $region15: #{tpu_custom_call.1} parent=1 // pred_check_branch
      %40 = sbr.rel (0) target = $region17
    $region16: #{tpu_custom_call.1} parent=1 // pred_region
      %s42 = ssub.s32 8192, 8192
      %43 = vsyncadd [#allocation6], %s42
      %s44 = sshll.u32 [#allocation7], 4
      %s45 = int_to_ptr.vmem [resolvable:$true] %s44
      %50 = dma.hbm_to_vmem [thread:$0]  %s3, 8192, %s45, [#allocation6], 256, 256, 16
    $region17: #{tpu_custom_call.1} parent=1 // pred_fallthru
      _
    // Predicated region
    $region18: #{tpu_custom_call.1} parent=1 // pred_check
      _
    $region19: #{tpu_custom_call.1} parent=1 // pred_check_branch
      %52 = sbr.rel (0) target = $region21
    $region20: #{tpu_custom_call.1} parent=1 // pred_region
      _
    $region21: #{tpu_custom_call.1} parent=1 // pred_fallthru
      _
    // Predicated region
    $region22: #{tpu_custom_call.1} parent=1 // pred_check
      _
    $region23: #{tpu_custom_call.1} parent=1 // pred_check_branch
      %54 = sbr.rel (0) target = $region25
    $region24: #{tpu_custom_call.1} parent=1 // pred_region
      %55 = dma.done [#allocation3], 128
    $region25: #{tpu_custom_call.1} parent=1 // pred_fallthru
      _
    // Predicated region
    $region26: #{tpu_custom_call.1} parent=1 // pred_check
      _
    $region27: #{tpu_custom_call.1} parent=1 // pred_check_branch
      %57 = sbr.rel (0) target = $region29
    $region28: #{tpu_custom_call.1} parent=1 // pred_region
      %58 = dma.done [#allocation6], 2048
    $region29: #{tpu_custom_call.1} parent=1 // pred_fallthru
      _
    // Predicated region
    $region30: #{tpu_custom_call.1} parent=1 // pred_check
      _
    $region31: #{tpu_custom_call.1} parent=1 // pred_check_branch
      %60 = sbr.rel (0) target = $region33
    $region32: #{tpu_custom_call.1} parent=1 // pred_region
      %61 = dma.done [#allocation6], 8192
    $region33: #{tpu_custom_call.1} parent=1 // pred_fallthru
      _
    %v63 = vld [vmem:[#allocation2] sm:$0xf]
    %v64 = vld [vmem:[#allocation2 + $0x4] sm:$0xf]
    %v65 = vld [vmem:[#allocation5] sm:$0xff]
    %v66 = vld [vmem:[#allocation5 + $0x8] sm:$0xff]
    %v67 = vld [vmem:[#allocation5 + $0x10] sm:$0xff]
    %v68 = vld [vmem:[#allocation5 + $0x18] sm:$0xff]
    %v69 = vld [vmem:[#allocation5 + $0x20] sm:$0xff]
    %v70 = vld [vmem:[#allocation5 + $0x28] sm:$0xff]
    %v71 = vld [vmem:[#allocation5 + $0x30] sm:$0xff]
    %v72 = vld [vmem:[#allocation5 + $0x38] sm:$0xff]
    %v73 = vld [vmem:[#allocation5 + $0x40] sm:$0xff]
    %v74 = vld [vmem:[#allocation5 + $0x48] sm:$0xff]
    %v75 = vld [vmem:[#allocation5 + $0x50] sm:$0xff]
    %v76 = vld [vmem:[#allocation5 + $0x58] sm:$0xff]
    %v77 = vld [vmem:[#allocation5 + $0x60] sm:$0xff]
    %v78 = vld [vmem:[#allocation5 + $0x68] sm:$0xff]
    %v79 = vld [vmem:[#allocation5 + $0x70] sm:$0xff]
    %v80 = vld [vmem:[#allocation5 + $0x78] sm:$0xff]
    %v81 = vld [vmem:[%s2] sm:$0x3]
    %v83 = vlaneseq
    %v84 = vshrl.u32 %v83, 7
    %v85 = vsub.s32 0, %v84
    %v86 = vrot.slane %v81, %v85
    %v87 = vlaneseq
    %v88 = vshrl.u32 %v87, 7
    %v89 = vsub.s32 1, %v88
    %v90 = vrot.slane %v81, %v89
    %v95 = vunpack.c.l.b16 %v63
    %v96 = vunpack.c.l.b16 %v64
    %v97 = vpack.c.b16 %v96, %v95
    %v115 = vunpack.c.l.b16 %v65
    %v116 = vunpack.c.h.b16 %v65
    %v117 = vunpack.c.l.b16 %v66
    %v118 = vunpack.c.h.b16 %v66
    %v119 = vunpack.c.l.b16 %v67
    %v120 = vunpack.c.h.b16 %v67
    %v121 = vunpack.c.l.b16 %v68
    %v122 = vunpack.c.h.b16 %v68
    %v123 = vunpack.c.l.b16 %v69
    %v124 = vunpack.c.h.b16 %v69
    %v125 = vunpack.c.l.b16 %v70
    %v126 = vunpack.c.h.b16 %v70
    %v127 = vunpack.c.l.b16 %v71
    %v128 = vunpack.c.h.b16 %v71
    %v129 = vunpack.c.l.b16 %v72
    %v130 = vunpack.c.h.b16 %v72
    %v131 = vunpack.c.l.b16 %v73
    %v132 = vunpack.c.h.b16 %v73
    %v133 = vunpack.c.l.b16 %v74
    %v134 = vunpack.c.h.b16 %v74
    %v135 = vunpack.c.l.b16 %v75
    %v136 = vunpack.c.h.b16 %v75
    %v137 = vunpack.c.l.b16 %v76
    %v138 = vunpack.c.h.b16 %v76
    %v139 = vunpack.c.l.b16 %v77
    %v140 = vunpack.c.h.b16 %v77
    %v141 = vunpack.c.l.b16 %v78
    %v142 = vunpack.c.h.b16 %v78
    %v143 = vunpack.c.l.b16 %v79
    %v144 = vunpack.c.h.b16 %v79
    %v145 = vunpack.c.l.b16 %v80
    %v146 = vunpack.c.h.b16 %v80
    %v147 = vpack.c.b16 %v117, %v115
    %v148 = vpack.c.b16 %v118, %v116
    %v149 = vpack.c.b16 %v121, %v119
    %v150 = vpack.c.b16 %v122, %v120
    %v151 = vpack.c.b16 %v125, %v123
    %v152 = vpack.c.b16 %v126, %v124
    %v153 = vpack.c.b16 %v129, %v127
    %v154 = vpack.c.b16 %v130, %v128
    %v155 = vpack.c.b16 %v133, %v131
    %v156 = vpack.c.b16 %v134, %v132
    %v157 = vpack.c.b16 %v137, %v135
    %v158 = vpack.c.b16 %v138, %v136
    %v159 = vpack.c.b16 %v141, %v139
    %v160 = vpack.c.b16 %v142, %v140
    %v161 = vpack.c.b16 %v145, %v143
    %v162 = vpack.c.b16 %v146, %v144
    %179 = vmatprep.subr.bf16.mxu0 %v148
    %180 = vmatpush1.bf16.msra.mxu0 %v147
    %181 = vmatprep.subr.bf16.mxu0 %v150
    %182 = vmatpush1.bf16.msra.mxu0 %v149
    %183 = vmatprep.subr.bf16.mxu0 %v152
    %184 = vmatpush1.bf16.msra.mxu0 %v151
    %185 = vmatprep.subr.bf16.mxu0 %v154
    %186 = vmatpush1.bf16.msra.mxu0 %v153
    %187 = vmatprep.subr.bf16.mxu0 %v156
    %188 = vmatpush1.bf16.msra.mxu0 %v155
    %189 = vmatprep.subr.bf16.mxu0 %v158
    %190 = vmatpush1.bf16.msra.mxu0 %v157
    %191 = vmatprep.subr.bf16.mxu0 %v160
    %192 = vmatpush1.bf16.msra.mxu0 %v159
    %193 = vmatprep.subr.bf16.mxu0 %v162
    %194 = vmatpush1.bf16.msra.mxu0 %v161
    %195 = vmatprep.subr.bf16.mxu0 0
    %196 = vmatpush1.bf16.msra.mxu0 0
    %197 = vmatprep.subr.bf16.mxu0 0
    %198 = vmatpush1.bf16.msra.mxu0 0
    %199 = vmatprep.subr.bf16.mxu0 0
    %200 = vmatpush1.bf16.msra.mxu0 0
    %201 = vmatprep.subr.bf16.mxu0 0
    %202 = vmatpush1.bf16.msra.mxu0 0
    %203 = vmatprep.subr.bf16.mxu0 0
    %204 = vmatpush1.bf16.msra.mxu0 0
    %205 = vmatprep.subr.bf16.mxu0 0
    %206 = vmatpush1.bf16.msra.mxu0 0
    %207 = vmatprep.subr.bf16.mxu0 0
    %208 = vmatpush1.bf16.msra.mxu0 0
    %209 = vmatprep.subr.bf16.mxu0 0
    %210 = vmatpush1.bf16.msra.mxu0 0
    %211 = vmatprep.mubr.bf16.mxu0 0
    %212 = vmatmul.mubr.bf16.gmra.mrb[0].mxu0 %v97
    %v213 = vpop.f32.mrb[0].mxu0
    %v214 = vadd.f32 %v86, %v213
    %v215 = vpop.f32.mrb[0].mxu0
    %v216 = vadd.f32 %v90, %v215
    %v217 = vpop.f32.mrb[0].mxu0
    %v218 = vadd.f32 %v86, %v217
    %v219 = vpop.f32.mrb[0].mxu0
    %v220 = vadd.f32 %v90, %v219
    %221 = vdwg.mxu0
    %v222 = vmul.f32 %v214, 0.01
    %v223 = vmul.f32 %v216, 0.01
    %v224 = vmul.f32 %v218, 0.01
    %v225 = vmul.f32 %v220, 0.01
    %v226 = vmax.f32 %v214, %v222
    %v227 = vmax.f32 %v216, %v223
    %v228 = vmax.f32 %v218, %v224
    %v229 = vmax.f32 %v220, %v225
    %v230 = vpack.c.bf16 %v228, %v226
    %v231 = vpack.c.bf16 %v229, %v227
    %v232 = vld [vmem:[#allocation7] sm:$0xff]
    %v233 = vld [vmem:[#allocation7 + $0x8] sm:$0xff]
    %v234 = vld [vmem:[#allocation7 + $0x10] sm:$0xff]
    %v235 = vld [vmem:[#allocation7 + $0x18] sm:$0xff]
    %v236 = vld [vmem:[#allocation7 + $0x20] sm:$0xff]
    %v237 = vld [vmem:[#allocation7 + $0x28] sm:$0xff]
    %v238 = vld [vmem:[#allocation7 + $0x30] sm:$0xff]
    %v239 = vld [vmem:[#allocation7 + $0x38] sm:$0xff]
    %v240 = vld [vmem:[#allocation7 + $0x40] sm:$0xff]
    %v241 = vld [vmem:[#allocation7 + $0x48] sm:$0xff]
    %v242 = vld [vmem:[#allocation7 + $0x50] sm:$0xff]
    %v243 = vld [vmem:[#allocation7 + $0x58] sm:$0xff]
    %v244 = vld [vmem:[#allocation7 + $0x60] sm:$0xff]
    %v245 = vld [vmem:[#allocation7 + $0x68] sm:$0xff]
    %v246 = vld [vmem:[#allocation7 + $0x70] sm:$0xff]
    %v247 = vld [vmem:[#allocation7 + $0x78] sm:$0xff]
    %v248 = vld [vmem:[#allocation7 + $0x80] sm:$0xff]
    %v249 = vld [vmem:[#allocation7 + $0x88] sm:$0xff]
    %v250 = vld [vmem:[#allocation7 + $0x90] sm:$0xff]
    %v251 = vld [vmem:[#allocation7 + $0x98] sm:$0xff]
    %v252 = vld [vmem:[#allocation7 + $0xa0] sm:$0xff]
    %v253 = vld [vmem:[#allocation7 + $0xa8] sm:$0xff]
    %v254 = vld [vmem:[#allocation7 + $0xb0] sm:$0xff]
    %v255 = vld [vmem:[#allocation7 + $0xb8] sm:$0xff]
    %v256 = vld [vmem:[#allocation7 + $0xc0] sm:$0xff]
    %v257 = vld [vmem:[#allocation7 + $0xc8] sm:$0xff]
    %v258 = vld [vmem:[#allocation7 + $0xd0] sm:$0xff]
    %v259 = vld [vmem:[#allocation7 + $0xd8] sm:$0xff]
    %v260 = vld [vmem:[#allocation7 + $0xe0] sm:$0xff]
    %v261 = vld [vmem:[#allocation7 + $0xe8] sm:$0xff]
    %v262 = vld [vmem:[#allocation7 + $0xf0] sm:$0xff]
    %v263 = vld [vmem:[#allocation7 + $0xf8] sm:$0xff]
    %v264 = vld [vmem:[#allocation7 + $0x100] sm:$0xff]
    %v265 = vld [vmem:[#allocation7 + $0x108] sm:$0xff]
    %v266 = vld [vmem:[#allocation7 + $0x110] sm:$0xff]
    %v267 = vld [vmem:[#allocation7 + $0x118] sm:$0xff]
    %v268 = vld [vmem:[#allocation7 + $0x120] sm:$0xff]
    %v269 = vld [vmem:[#allocation7 + $0x128] sm:$0xff]
    %v270 = vld [vmem:[#allocation7 + $0x130] sm:$0xff]
    %v271 = vld [vmem:[#allocation7 + $0x138] sm:$0xff]
    %v272 = vld [vmem:[#allocation7 + $0x140] sm:$0xff]
    %v273 = vld [vmem:[#allocation7 + $0x148] sm:$0xff]
    %v274 = vld [vmem:[#allocation7 + $0x150] sm:$0xff]
    %v275 = vld [vmem:[#allocation7 + $0x158] sm:$0xff]
    %v276 = vld [vmem:[#allocation7 + $0x160] sm:$0xff]
    %v277 = vld [vmem:[#allocation7 + $0x168] sm:$0xff]
    %v278 = vld [vmem:[#allocation7 + $0x170] sm:$0xff]
    %v279 = vld [vmem:[#allocation7 + $0x178] sm:$0xff]
    %v280 = vld [vmem:[#allocation7 + $0x180] sm:$0xff]
    %v281 = vld [vmem:[#allocation7 + $0x188] sm:$0xff]
    %v282 = vld [vmem:[#allocation7 + $0x190] sm:$0xff]
    %v283 = vld [vmem:[#allocation7 + $0x198] sm:$0xff]
    %v284 = vld [vmem:[#allocation7 + $0x1a0] sm:$0xff]
    %v285 = vld [vmem:[#allocation7 + $0x1a8] sm:$0xff]
    %v286 = vld [vmem:[#allocation7 + $0x1b0] sm:$0xff]
    %v287 = vld [vmem:[#allocation7 + $0x1b8] sm:$0xff]
    %v288 = vld [vmem:[#allocation7 + $0x1c0] sm:$0xff]
    %v289 = vld [vmem:[#allocation7 + $0x1c8] sm:$0xff]
    %v290 = vld [vmem:[#allocation7 + $0x1d0] sm:$0xff]
    %v291 = vld [vmem:[#allocation7 + $0x1d8] sm:$0xff]
    %v292 = vld [vmem:[#allocation7 + $0x1e0] sm:$0xff]
    %v293 = vld [vmem:[#allocation7 + $0x1e8] sm:$0xff]
    %v294 = vld [vmem:[#allocation7 + $0x1f0] sm:$0xff]
    %v295 = vld [vmem:[#allocation7 + $0x1f8] sm:$0xff]
    %v296 = vld [vmem:[%s4] sm:$0xf]
    %v298 = vlaneseq
    %v299 = vshrl.u32 %v298, 7
    %v300 = vsub.s32 0, %v299
    %v301 = vrot.slane %v296, %v300
    %v302 = vlaneseq
    %v303 = vshrl.u32 %v302, 7
    %v304 = vsub.s32 1, %v303
    %v305 = vrot.slane %v296, %v304
    %v306 = vlaneseq
    %v307 = vshrl.u32 %v306, 7
    %v308 = vsub.s32 2, %v307
    %v309 = vrot.slane %v296, %v308
    %v310 = vlaneseq
    %v311 = vshrl.u32 %v310, 7
    %v312 = vsub.s32 3, %v311
    %v313 = vrot.slane %v296, %v312
    %v382 = vunpack.c.l.b16 %v232
    %v383 = vunpack.c.h.b16 %v232
    %v384 = vunpack.c.l.b16 %v233
    %v385 = vunpack.c.h.b16 %v233
    %v386 = vunpack.c.l.b16 %v234
    %v387 = vunpack.c.h.b16 %v234
    %v388 = vunpack.c.l.b16 %v235
    %v389 = vunpack.c.h.b16 %v235
    %v390 = vunpack.c.l.b16 %v236
    %v391 = vunpack.c.h.b16 %v236
    %v392 = vunpack.c.l.b16 %v237
    %v393 = vunpack.c.h.b16 %v237
    %v394 = vunpack.c.l.b16 %v238
    %v395 = vunpack.c.h.b16 %v238
    %v396 = vunpack.c.l.b16 %v239
    %v397 = vunpack.c.h.b16 %v239
    %v398 = vunpack.c.l.b16 %v240
    %v399 = vunpack.c.h.b16 %v240
    %v400 = vunpack.c.l.b16 %v241
    %v401 = vunpack.c.h.b16 %v241
    %v402 = vunpack.c.l.b16 %v242
    %v403 = vunpack.c.h.b16 %v242
    %v404 = vunpack.c.l.b16 %v243
    %v405 = vunpack.c.h.b16 %v243
    %v406 = vunpack.c.l.b16 %v244
    %v407 = vunpack.c.h.b16 %v244
    %v408 = vunpack.c.l.b16 %v245
    %v409 = vunpack.c.h.b16 %v245
    %v410 = vunpack.c.l.b16 %v246
    %v411 = vunpack.c.h.b16 %v246
    %v412 = vunpack.c.l.b16 %v247
    %v413 = vunpack.c.h.b16 %v247
    %v414 = vunpack.c.l.b16 %v248
    %v415 = vunpack.c.h.b16 %v248
    %v416 = vunpack.c.l.b16 %v249
    %v417 = vunpack.c.h.b16 %v249
    %v418 = vunpack.c.l.b16 %v250
    %v419 = vunpack.c.h.b16 %v250
    %v420 = vunpack.c.l.b16 %v251
    %v421 = vunpack.c.h.b16 %v251
    %v422 = vunpack.c.l.b16 %v252
    %v423 = vunpack.c.h.b16 %v252
    %v424 = vunpack.c.l.b16 %v253
    %v425 = vunpack.c.h.b16 %v253
    %v426 = vunpack.c.l.b16 %v254
    %v427 = vunpack.c.h.b16 %v254
    %v428 = vunpack.c.l.b16 %v255
    %v429 = vunpack.c.h.b16 %v255
    %v430 = vunpack.c.l.b16 %v256
    %v431 = vunpack.c.h.b16 %v256
    %v432 = vunpack.c.l.b16 %v257
    %v433 = vunpack.c.h.b16 %v257
    %v434 = vunpack.c.l.b16 %v258
    %v435 = vunpack.c.h.b16 %v258
    %v436 = vunpack.c.l.b16 %v259
    %v437 = vunpack.c.h.b16 %v259
    %v438 = vunpack.c.l.b16 %v260
    %v439 = vunpack.c.h.b16 %v260
    %v440 = vunpack.c.l.b16 %v261
    %v441 = vunpack.c.h.b16 %v261
    %v442 = vunpack.c.l.b16 %v262
    %v443 = vunpack.c.h.b16 %v262
    %v444 = vunpack.c.l.b16 %v263
    %v445 = vunpack.c.h.b16 %v263
    %v446 = vunpack.c.l.b16 %v264
    %v447 = vunpack.c.h.b16 %v264
    %v448 = vunpack.c.l.b16 %v265
    %v449 = vunpack.c.h.b16 %v265
    %v450 = vunpack.c.l.b16 %v266
    %v451 = vunpack.c.h.b16 %v266
    %v452 = vunpack.c.l.b16 %v267
    %v453 = vunpack.c.h.b16 %v267
    %v454 = vunpack.c.l.b16 %v268
    %v455 = vunpack.c.h.b16 %v268
    %v456 = vunpack.c.l.b16 %v269
    %v457 = vunpack.c.h.b16 %v269
    %v458 = vunpack.c.l.b16 %v270
    %v459 = vunpack.c.h.b16 %v270
    %v460 = vunpack.c.l.b16 %v271
    %v461 = vunpack.c.h.b16 %v271
    %v462 = vunpack.c.l.b16 %v272
    %v463 = vunpack.c.h.b16 %v272
    %v464 = vunpack.c.l.b16 %v273
    %v465 = vunpack.c.h.b16 %v273
    %v466 = vunpack.c.l.b16 %v274
    %v467 = vunpack.c.h.b16 %v274
    %v468 = vunpack.c.l.b16 %v275
    %v469 = vunpack.c.h.b16 %v275
    %v470 = vunpack.c.l.b16 %v276
    %v471 = vunpack.c.h.b16 %v276
    %v472 = vunpack.c.l.b16 %v277
    %v473 = vunpack.c.h.b16 %v277
    %v474 = vunpack.c.l.b16 %v278
    %v475 = vunpack.c.h.b16 %v278
    %v476 = vunpack.c.l.b16 %v279
    %v477 = vunpack.c.h.b16 %v279
    %v478 = vunpack.c.l.b16 %v280
    %v479 = vunpack.c.h.b16 %v280
    %v480 = vunpack.c.l.b16 %v281
    %v481 = vunpack.c.h.b16 %v281
    %v482 = vunpack.c.l.b16 %v282
    %v483 = vunpack.c.h.b16 %v282
    %v484 = vunpack.c.l.b16 %v283
    %v485 = vunpack.c.h.b16 %v283
    %v486 = vunpack.c.l.b16 %v284
    %v487 = vunpack.c.h.b16 %v284
    %v488 = vunpack.c.l.b16 %v285
    %v489 = vunpack.c.h.b16 %v285
    %v490 = vunpack.c.l.b16 %v286
    %v491 = vunpack.c.h.b16 %v286
    %v492 = vunpack.c.l.b16 %v287
    %v493 = vunpack.c.h.b16 %v287
    %v494 = vunpack.c.l.b16 %v288
    %v495 = vunpack.c.h.b16 %v288
    %v496 = vunpack.c.l.b16 %v289
    %v497 = vunpack.c.h.b16 %v289
    %v498 = vunpack.c.l.b16 %v290
    %v499 = vunpack.c.h.b16 %v290
    %v500 = vunpack.c.l.b16 %v291
    %v501 = vunpack.c.h.b16 %v291
    %v502 = vunpack.c.l.b16 %v292
    %v503 = vunpack.c.h.b16 %v292
    %v504 = vunpack.c.l.b16 %v293
    %v505 = vunpack.c.h.b16 %v293
    %v506 = vunpack.c.l.b16 %v294
    %v507 = vunpack.c.h.b16 %v294
    %v508 = vunpack.c.l.b16 %v295
    %v509 = vunpack.c.h.b16 %v295
    %v510 = vpack.c.b16 %v386, %v382
    %v511 = vpack.c.b16 %v387, %v383
    %v512 = vpack.c.b16 %v388, %v384
    %v513 = vpack.c.b16 %v389, %v385
    %v514 = vpack.c.b16 %v394, %v390
    %v515 = vpack.c.b16 %v395, %v391
    %v516 = vpack.c.b16 %v396, %v392
    %v517 = vpack.c.b16 %v397, %v393
    %v518 = vpack.c.b16 %v402, %v398
    %v519 = vpack.c.b16 %v403, %v399
    %v520 = vpack.c.b16 %v404, %v400
    %v521 = vpack.c.b16 %v405, %v401
    %v522 = vpack.c.b16 %v410, %v406
    %v523 = vpack.c.b16 %v411, %v407
    %v524 = vpack.c.b16 %v412, %v408
    %v525 = vpack.c.b16 %v413, %v409
    %v526 = vpack.c.b16 %v418, %v414
    %v527 = vpack.c.b16 %v419, %v415
    %v528 = vpack.c.b16 %v420, %v416
    %v529 = vpack.c.b16 %v421, %v417
    %v530 = vpack.c.b16 %v426, %v422
    %v531 = vpack.c.b16 %v427, %v423
    %v532 = vpack.c.b16 %v428, %v424
    %v533 = vpack.c.b16 %v429, %v425
    %v534 = vpack.c.b16 %v434, %v430
    %v535 = vpack.c.b16 %v435, %v431
    %v536 = vpack.c.b16 %v436, %v432
    %v537 = vpack.c.b16 %v437, %v433
    %v538 = vpack.c.b16 %v442, %v438
    %v539 = vpack.c.b16 %v443, %v439
    %v540 = vpack.c.b16 %v444, %v440
    %v541 = vpack.c.b16 %v445, %v441
    %v542 = vpack.c.b16 %v450, %v446
    %v543 = vpack.c.b16 %v451, %v447
    %v544 = vpack.c.b16 %v452, %v448
    %v545 = vpack.c.b16 %v453, %v449
    %v546 = vpack.c.b16 %v458, %v454
    %v547 = vpack.c.b16 %v459, %v455
    %v548 = vpack.c.b16 %v460, %v456
    %v549 = vpack.c.b16 %v461, %v457
    %v550 = vpack.c.b16 %v466, %v462
    %v551 = vpack.c.b16 %v467, %v463
    %v552 = vpack.c.b16 %v468, %v464
    %v553 = vpack.c.b16 %v469, %v465
    %v554 = vpack.c.b16 %v474, %v470
    %v555 = vpack.c.b16 %v475, %v471
    %v556 = vpack.c.b16 %v476, %v472
    %v557 = vpack.c.b16 %v477, %v473
    %v558 = vpack.c.b16 %v482, %v478
    %v559 = vpack.c.b16 %v483, %v479
    %v560 = vpack.c.b16 %v484, %v480
    %v561 = vpack.c.b16 %v485, %v481
    %v562 = vpack.c.b16 %v490, %v486
    %v563 = vpack.c.b16 %v491, %v487
    %v564 = vpack.c.b16 %v492, %v488
    %v565 = vpack.c.b16 %v493, %v489
    %v566 = vpack.c.b16 %v498, %v494
    %v567 = vpack.c.b16 %v499, %v495
    %v568 = vpack.c.b16 %v500, %v496
    %v569 = vpack.c.b16 %v501, %v497
    %v570 = vpack.c.b16 %v506, %v502
    %v571 = vpack.c.b16 %v507, %v503
    %v572 = vpack.c.b16 %v508, %v504
    %v573 = vpack.c.b16 %v509, %v505
    %638 = vmatprep.subr.bf16.mxu0 %v511
    %639 = vmatpush1.bf16.msra.mxu0 %v510
    %640 = vmatprep.subr.bf16.mxu0 %v515
    %641 = vmatpush1.bf16.msra.mxu0 %v514
    %642 = vmatprep.subr.bf16.mxu0 %v519
    %643 = vmatpush1.bf16.msra.mxu0 %v518
    %644 = vmatprep.subr.bf16.mxu0 %v523
    %645 = vmatpush1.bf16.msra.mxu0 %v522
    %646 = vmatprep.subr.bf16.mxu0 %v527
    %647 = vmatpush1.bf16.msra.mxu0 %v526
    %648 = vmatprep.subr.bf16.mxu0 %v531
    %649 = vmatpush1.bf16.msra.mxu0 %v530
    %650 = vmatprep.subr.bf16.mxu0 %v535
    %651 = vmatpush1.bf16.msra.mxu0 %v534
    %652 = vmatprep.subr.bf16.mxu0 %v539
    %653 = vmatpush1.bf16.msra.mxu0 %v538
    %654 = vmatprep.subr.bf16.mxu0 %v543
    %655 = vmatpush1.bf16.msra.mxu0 %v542
    %656 = vmatprep.subr.bf16.mxu0 %v547
    %657 = vmatpush1.bf16.msra.mxu0 %v546
    %658 = vmatprep.subr.bf16.mxu0 %v551
    %659 = vmatpush1.bf16.msra.mxu0 %v550
    %660 = vmatprep.subr.bf16.mxu0 %v555
    %661 = vmatpush1.bf16.msra.mxu0 %v554
    %662 = vmatprep.subr.bf16.mxu0 %v559
    %663 = vmatpush1.bf16.msra.mxu0 %v558
    %664 = vmatprep.subr.bf16.mxu0 %v563
    %665 = vmatpush1.bf16.msra.mxu0 %v562
    %666 = vmatprep.subr.bf16.mxu0 %v567
    %667 = vmatpush1.bf16.msra.mxu0 %v566
    %668 = vmatprep.subr.bf16.mxu0 %v571
    %669 = vmatpush1.bf16.msra.mxu0 %v570
    %670 = vmatprep.mubr.bf16.mxu0 %v231
    %671 = vmatmul.mubr.bf16.gmra.mrb[0].mxu0 %v230
    %v672 = vpop.f32.mrb[0].mxu0
    %v673 = vadd.f32 %v301, %v672
    %v674 = vpop.f32.mrb[0].mxu0
    %v675 = vadd.f32 %v305, %v674
    %v676 = vpop.f32.mrb[0].mxu0
    %v677 = vadd.f32 %v301, %v676
    %v678 = vpop.f32.mrb[0].mxu0
    %v679 = vadd.f32 %v305, %v678
    %680 = vdwg.mxu0
    %681 = vmatprep.subr.bf16.mxu0 %v513
    %682 = vmatpush1.bf16.msra.mxu0 %v512
    %683 = vmatprep.subr.bf16.mxu0 %v517
    %684 = vmatpush1.bf16.msra.mxu0 %v516
    %685 = vmatprep.subr.bf16.mxu0 %v521
    %686 = vmatpush1.bf16.msra.mxu0 %v520
    %687 = vmatprep.subr.bf16.mxu0 %v525
    %688 = vmatpush1.bf16.msra.mxu0 %v524
    %689 = vmatprep.subr.bf16.mxu0 %v529
    %690 = vmatpush1.bf16.msra.mxu0 %v528
    %691 = vmatprep.subr.bf16.mxu0 %v533
    %692 = vmatpush1.bf16.msra.mxu0 %v532
    %693 = vmatprep.subr.bf16.mxu0 %v537
    %694 = vmatpush1.bf16.msra.mxu0 %v536
    %695 = vmatprep.subr.bf16.mxu0 %v541
    %696 = vmatpush1.bf16.msra.mxu0 %v540
    %697 = vmatprep.subr.bf16.mxu0 %v545
    %698 = vmatpush1.bf16.msra.mxu0 %v544
    %699 = vmatprep.subr.bf16.mxu0 %v549
    %700 = vmatpush1.bf16.msra.mxu0 %v548
    %701 = vmatprep.subr.bf16.mxu0 %v553
    %702 = vmatpush1.bf16.msra.mxu0 %v552
    %703 = vmatprep.subr.bf16.mxu0 %v557
    %704 = vmatpush1.bf16.msra.mxu0 %v556
    %705 = vmatprep.subr.bf16.mxu0 %v561
    %706 = vmatpush1.bf16.msra.mxu0 %v560
    %707 = vmatprep.subr.bf16.mxu0 %v565
    %708 = vmatpush1.bf16.msra.mxu0 %v564
    %709 = vmatprep.subr.bf16.mxu0 %v569
    %710 = vmatpush1.bf16.msra.mxu0 %v568
    %711 = vmatprep.subr.bf16.mxu0 %v573
    %712 = vmatpush1.bf16.msra.mxu0 %v572
    %713 = vmatprep.mubr.bf16.mxu0 %v231
    %714 = vmatmul.mubr.bf16.gmra.mrb[0].mxu0 %v230
    %v715 = vpop.f32.mrb[0].mxu0
    %v716 = vadd.f32 %v309, %v715
    %v717 = vpop.f32.mrb[0].mxu0
    %v718 = vadd.f32 %v313, %v717
    %v719 = vpop.f32.mrb[0].mxu0
    %v720 = vadd.f32 %v309, %v719
    %v721 = vpop.f32.mrb[0].mxu0
    %v722 = vadd.f32 %v313, %v721
    %723 = vdwg.mxu0
    %724 = vst [vmem:[#allocation8] sm:$0xff] %v673
    %725 = vst [vmem:[#allocation8 + $0x8] sm:$0xff] %v675
    %726 = vst [vmem:[#allocation8 + $0x10] sm:$0xff] %v716
    %727 = vst [vmem:[#allocation8 + $0x18] sm:$0xff] %v718
    %728 = vst [vmem:[#allocation8 + $0x20] sm:$0xff] %v677
    %729 = vst [vmem:[#allocation8 + $0x28] sm:$0xff] %v679
    %730 = vst [vmem:[#allocation8 + $0x30] sm:$0xff] %v720
    %731 = vst [vmem:[#allocation8 + $0x38] sm:$0xff] %v722
    // Predicated region
    $region34: #{tpu_custom_call.1} parent=1 // pred_check
      _
    $region35: #{tpu_custom_call.1} parent=1 // pred_check_branch
      %733 = sbr.rel (0) target = $region37
    $region36: #{tpu_custom_call.1} parent=1 // pred_region
      %s735 = ssub.s32 1024, 1024
      %736 = vsyncadd [#allocation4], %s735
      %s737 = sshll.u32 [#allocation8], 4
      %s738 = int_to_ptr.vmem [resolvable:$true] %s737
      %743 = dma.vmem_to_hbm [thread:$0]  %s738, 1024, %s5, [#allocation4], 512, 512, 32
    $region37: #{tpu_custom_call.1} parent=1 // pred_fallthru
      _
    // Predicated region
    $region38: #{tpu_custom_call.1} parent=1 // pred_check
      _
    $region39: #{tpu_custom_call.1} parent=1 // pred_check_branch
      %745 = sbr.rel (0) target = $region41
    $region40: #{tpu_custom_call.1} parent=1 // pred_region
      %746 = dma.done [#allocation4], 1024
    $region41: #{tpu_custom_call.1} parent=1 // pred_fallthru
      _
    %747 = vsyncpa [#allocation3], 1
    %748 = vsyncpa [#allocation6], 1
    %749 = vsyncpa [#allocation4], 1

</llo_original>
